<compile_context>
chip_gen: v7x
topology: tpu7x:2x2x1
jax: 0.10.0
libtpu: 0.0.40
codegen_flags: <defaults>
</compile_context>

<pallas_src>
import functools

import jax
import jax.numpy as jnp
from jax.experimental import pallas as pl
from jax.experimental.pallas import tpu as pltpu

_EPS = 1e-8
_LANES = 128


def _query_tpu_config():
    """Best-effort hardware query; falls back to v5e/v6e-like defaults."""
    vmem_bytes = 128 * 1024 * 1024
    num_cores = 1
    try:
        info = pltpu.get_tpu_info()
        vmem_bytes = int(getattr(info, "vmem_capacity_bytes", vmem_bytes))
        for attr in ("num_cores", "core_count", "num_tensorcores"):
            val = getattr(info, attr, None)
            if val:
                num_cores = int(val)
                break
    except Exception:
        pass
    return vmem_bytes, max(num_cores, 1)


_VMEM_BYTES, _TC_COUNT = _query_tpu_config()
_SMALL_VMEM = _VMEM_BYTES <= 64 * 1024 * 1024        # v7x-class: 64 MiB / TC
_MAX_ROW_TILE = 4096 if _SMALL_VMEM else 8192        # rows per block
_NUM_SHARDS = max(_TC_COUNT, 2 if _SMALL_VMEM else 1)


def _sketch_mask_loss_kernel(*refs, row_tile, steps_per_shard, n_full_blocks,
                             total_grid_blocks, last_valid_row, lanes_last_row,
                             has_mask):
    if has_mask:
        pred_ref, target_ref, mask_ref, out_ref, acc_ref = refs
    else:
        pred_ref, target_ref, out_ref, acc_ref = refs
        mask_ref = None

    c = pl.program_id(0)   # shard axis ("parallel")
    i = pl.program_id(1)   # row-block axis ("arbitrary" reduction)

    @pl.when(i == 0)
    def _init():
        acc_ref[...] = jnp.zeros_like(acc_ref)

    logical_block = c * steps_per_shard + i
    acc_rows = acc_ref.shape[1]

    def _fold(v):
        # Fold the row tile down to the accumulator shape with pure VPU adds
        # (reshape keeps every (8,128) tile intact -> no data movement).
        if row_tile == acc_rows:
            return v
        return jnp.sum(v.reshape(row_tile // acc_rows, acc_rows, _LANES), axis=0)

    def _accumulate(p, t, m):
        # BCE with folded epsilons and no (1 - t) temporary:
        #   -(t*log(p+eps) + (1-t)*log(1-p+eps)) == -(b + t*(a - b))
        a = jnp.log(p + _EPS)
        b = jnp.log((1.0 + _EPS) - p)
        loss_pp = -(b + t * (a - b))
        if m is None:                      # no-mask interior block: mask == 1
            mask_w = t
            m_loss = loss_pp
        else:
            mask_w = m * t
            m_loss = m * loss_pp
        w_loss = t * m_loss
        acc_ref[0] += _fold(mask_w)        # W = sum(mask * target)
        if has_mask:
            acc_ref[1] += _fold(m)         # sum(mask); mask=None -> known = n
        acc_ref[2] += _fold(w_loss)        # sum(mask_W * loss)
        acc_ref[3] += _fold(m_loss)        # sum(mask * loss)

    def _interior():
        p = pred_ref[...].astype(jnp.float32)
        t = target_ref[...].astype(jnp.float32)
        m = mask_ref[...].astype(jnp.float32) if has_mask else None
        _accumulate(p, t, m)

    def _tail():
        # Row-level validity (no int32 flat-index overflow) + lane-level check
        # only for the single partial row.  Sanitize before the log so a
        # 0 * NaN can never leak in from undefined out-of-bounds block data.
        row_start = logical_block * row_tile
        row_ids = jax.lax.broadcasted_iota(jnp.int32, (row_tile, _LANES), 0)
        lane_ids = jax.lax.broadcasted_iota(jnp.int32, (row_tile, _LANES), 1)
        g_row = row_start + row_ids
        valid = (g_row < last_valid_row) | (
            (g_row == last_valid_row) & (lane_ids < lanes_last_row))
        p = jnp.where(valid, pred_ref[...].astype(jnp.float32), 0.5)
        t = jnp.where(valid, target_ref[...].astype(jnp.float32), 0.0)
        if has_mask:
            m = jnp.where(valid, mask_ref[...].astype(jnp.float32), 0.0)
        else:
            m = valid.astype(jnp.float32)
        _accumulate(p, t, m)

    need_full = n_full_blocks > 0                   # static
    need_tail = total_grid_blocks > n_full_blocks   # static
    if need_full and need_tail:
        is_tail = logical_block >= n_full_blocks

        @pl.when(jnp.logical_not(is_tail))
        def _():
            _interior()

        @pl.when(is_tail)
        def _():
            _tail()
    elif need_tail:
        _tail()
    else:
        _interior()

    @pl.when(i == steps_per_shard - 1)
    def _finalize():
        w_sum = jnp.sum(acc_ref[0])
        m_sum = jnp.sum(acc_ref[1])
        lw_sum = jnp.sum(acc_ref[2])
        lm_sum = jnp.sum(acc_ref[3])
        lane = jax.lax.broadcasted_iota(jnp.int32, (1, 1, _LANES), 2)
        out_ref[...] = (jnp.where(lane == 0, w_sum, 0.0)
                        + jnp.where(lane == 1, m_sum, 0.0)
                        + jnp.where(lane == 2, lw_sum, 0.0)
                        + jnp.where(lane == 3, lm_sum, 0.0))


def _flat2d(x, n_padded):
    flat = x.reshape(-1)
    pad = n_padded - flat.shape[0]
    if pad:
        # Only happens when the element count is not a multiple of 128.
        flat = jnp.pad(flat, (0, pad))
    return flat.reshape(n_padded // _LANES, _LANES)


@jax.jit
def _sketch_mask_loss_impl(pred, target, mask):
    has_mask = mask is not None
    n = pred.size

    n_padded = n if n % _LANES == 0 else (-(-n // _LANES)) * _LANES
    rows = n_padded // _LANES

    # Sublane granularity satisfying the packing of the narrowest input dtype
    # (8 for 4-byte, 16 for 2-byte, 32 for 1-byte).
    itemsizes = [pred.dtype.itemsize, target.dtype.itemsize]
    if has_mask:
        itemsizes.append(mask.dtype.itemsize)
    gran = 32 // min(itemsizes)

    if rows >= gran:
        row_tile = min(_MAX_ROW_TILE, (rows // gran) * gran)
    else:
        row_tile = rows            # block == full sublane extent
    acc_rows = 8 if row_tile % 8 == 0 else row_tile

    total_blocks = -(-rows // row_tile)
    n_shards = _NUM_SHARDS if total_blocks >= _NUM_SHARDS else 1
    steps_per_shard = -(-total_blocks // n_shards)
    total_grid_blocks = n_shards * steps_per_shard
    last_block = total_blocks - 1

    block_elems = row_tile * _LANES
    n_full_blocks = n // block_elems           # blocks with no invalid elems
    last_valid_row = (n - 1) // _LANES
    lanes_last_row = n - last_valid_row * _LANES

    def in_map(c, i):
        # Clamp the DMA so we never fetch a fully out-of-bounds block; the
        # kernel masks the logical overrun region itself (tail path only).
        return (jnp.minimum(c * steps_per_shard + i, last_block), 0)

    tile_spec = pl.BlockSpec((row_tile, _LANES), in_map)

    inputs = [_flat2d(pred, n_padded), _flat2d(target, n_padded)]
    in_specs = [tile_spec, tile_spec]
    if has_mask:
        inputs.append(_flat2d(mask, n_padded))
        in_specs.append(tile_spec)

    # Double-buffered input blocks + generous headroom for the full-tile f32
    # elementwise intermediates, capped at 3/4 of physical VMEM.
    block_bytes = sum(2 * row_tile * _LANES * s for s in itemsizes)
    vmem_need = block_bytes + 14 * row_tile * _LANES * 4 + (2 << 20)
    vmem_limit = int(max(min(vmem_need, (_VMEM_BYTES * 3) // 4), 16 << 20))

    kernel = functools.partial(
        _sketch_mask_loss_kernel,
        row_tile=row_tile,
        steps_per_shard=steps_per_shard,
        n_full_blocks=n_full_blocks,
        total_grid_blocks=total_grid_blocks,
        last_valid_row=last_valid_row,
        lanes_last_row=lanes_last_row,
        has_mask=has_mask,
    )

    partials = pl.pallas_call(
        kernel,
        out_shape=jax.ShapeDtypeStruct((n_shards, 1, _LANES), jnp.float32),
        grid_spec=pltpu.PrefetchScalarGridSpec(
            num_scalar_prefetch=0,
            grid=(n_shards, steps_per_shard),
            in_specs=in_specs,
            out_specs=pl.BlockSpec((1, 1, _LANES), lambda c, i: (c, 0, 0)),
            scratch_shapes=[pltpu.VMEM((4, acc_rows, _LANES), jnp.float32)],
        ),
        compiler_params=pltpu.CompilerParams(
            dimension_semantics=("parallel", "arbitrary"),
            vmem_limit_bytes=vmem_limit,
        ),
    )(*inputs)

    sums = jnp.sum(partials[:, 0, :4], axis=0)
    w = sums[0]
    m_total = sums[1] if has_mask else jnp.float32(n)   # mask=None: sum(mask)=n
    lw, lm = sums[2], sums[3]
    b = m_total - w
    lb = lm - lw
    # Same as torch: no epsilon guard on W/B (inf/nan if a class is absent).
    return lw / w + lb / b


def sketch_mask_loss(pred, target, mask=None):
    """JAX/Pallas equivalent of SketchMaskLoss.forward (returns a scalar)."""
    return _sketch_mask_loss_impl(pred, target, mask)


def _reference(pred, target, mask=None):
    pred = pred.astype(jnp.float32)
    target = target.astype(jnp.float32)
    loss_pp = -(target * jnp.log(pred + _EPS)
                + (1.0 - target) * jnp.log(1.0 - pred + _EPS))
    if mask is not None:
        mask = mask.astype(jnp.float32)
        mask_w, mask_b = mask * target, mask * (1.0 - target)
    else:
        mask_w, mask_b = target, 1.0 - target
    W, B = jnp.sum(mask_w), jnp.sum(mask_b)
    return jnp.sum(mask_w * loss_pp) / W + jnp.sum(mask_b * loss_pp) / B


if __name__ == "__main__":
    key = jax.random.PRNGKey(0)
    ks = jax.random.split(key, 9)

    def make_inputs(kp, kt, km, shape, tm_dtype):
        pred = jax.random.uniform(kp, shape, jnp.float32, minval=0.01, maxval=0.99)
        target = (jax.random.uniform(kt, shape) > 0.5).astype(tm_dtype)
        mask = (jax.random.uniform(km, shape) > 0.3).astype(tm_dtype)
        return pred, target, mask

    checks = []

    # Main NCHW case; target/mask kept narrow (bf16) on the HBM side.
    p1, t1, m1 = make_inputs(ks[0], ks[1], ks[2], (2, 4, 16, 16), jnp.bfloat16)
    checks.append((sketch_mask_loss(p1, t1, m1), _reference(p1, t1, m1)))
    checks.append((sketch_mask_loss(p1, t1), _reference(p1, t1)))  # mask=None

    # Non-lane-aligned case: exercises tail padding + gated tail block path.
    p2, t2, m2 = make_inputs(ks[3], ks[4], ks[5], (2, 3, 30, 30), jnp.bfloat16)
    checks.append((sketch_mask_loss(p2, t2, m2), _reference(p2, t2, m2)))
    checks.append((sketch_mask_loss(p2, t2), _reference(p2, t2)))  # no-mask tail

    # Tiny case (< 8 rows), all-f32 path.
    p3, t3, m3 = make_inputs(ks[6], ks[7], ks[8], (1, 1, 8, 16), jnp.float32)
    checks.append((sketch_mask_loss(p3, t3, m3), _reference(p3, t3, m3)))

    for got, ref in checks:
        got = jax.block_until_ready(got)
        assert jnp.allclose(got, ref, rtol=1e-5, atol=1e-5), (got, ref)

    print("KERNEL_OK")
</pallas_src>

<mosaic_0001>
module attributes {stable_mosaic.version = 11 : i64} {
  func.func @_sketch_mask_loss_kernel(%arg0: i32, %arg1: i32, %arg2: memref<16x128xf32, #tpu.memory_space<vmem>>, %arg3: memref<16x128xbf16, #tpu.memory_space<vmem>>, %arg4: memref<16x128xbf16, #tpu.memory_space<vmem>>, %arg5: memref<1x1x128xf32, #tpu.memory_space<vmem>>, %arg6: memref<4x8x128xf32, #tpu.memory_space<vmem>>) attributes {dimension_semantics = [#tpu.dimension_semantics<parallel>, #tpu.dimension_semantics<arbitrary>], iteration_bounds = array<i64: 1, 1>, scalar_prefetch = 0 : i64, scratch_operands = 1 : i64, tpu.core_type = #tpu.core_type<tc>, window_params = [{transform_indices = @transform_0, window_bounds = array<i64: 16, 128>}, {transform_indices = @transform_1, window_bounds = array<i64: 16, 128>}, {transform_indices = @transform_2, window_bounds = array<i64: 16, 128>}, {transform_indices = @transform_3, window_bounds = array<i64: 1, 1, 128>}]} {
    %c0_i32 = arith.constant 0 : i32
    %0 = arith.cmpi eq, %arg1, %c0_i32 : i32
    %1 = arith.extui %0 : i1 to i32
    %c0_i32_0 = arith.constant 0 : i32
    %2 = arith.cmpi ne, %1, %c0_i32_0 : i32
    scf.if %2 {
      %cst_35 = arith.constant 0.000000e+00 : f32
      %57 = vector.broadcast %cst_35 : f32 to vector<4x8x128xf32>
      %c0_36 = arith.constant 0 : index
      %c0_37 = arith.constant 0 : index
      %c0_38 = arith.constant 0 : index
      %58 = vector.load %arg6[%c0_36, %c0_37, %c0_38] : memref<4x8x128xf32, #tpu.memory_space<vmem>>, vector<4x8x128xf32>
      tpu.vector_store %arg6[%c0_36, %c0_37, %c0_38], %57 {strides = array<i32>} : memref<4x8x128xf32, #tpu.memory_space<vmem>>, vector<4x8x128xf32>,
    } else {
    }
    %c0 = arith.constant 0 : index
    %c0_1 = arith.constant 0 : index
    %3 = vector.load %arg2[%c0, %c0_1] : memref<16x128xf32, #tpu.memory_space<vmem>>, vector<16x128xf32>
    %c0_2 = arith.constant 0 : index
    %c0_3 = arith.constant 0 : index
    %4 = vector.load %arg3[%c0_2, %c0_3] : memref<16x128xbf16, #tpu.memory_space<vmem>>, vector<16x128xbf16>
    %5 = arith.extf %4 : vector<16x128xbf16> to vector<16x128xf32>
    %c0_4 = arith.constant 0 : index
    %c0_5 = arith.constant 0 : index
    %6 = vector.load %arg4[%c0_4, %c0_5] : memref<16x128xbf16, #tpu.memory_space<vmem>>, vector<16x128xbf16>
    %7 = arith.extf %6 : vector<16x128xbf16> to vector<16x128xf32>
    %cst = arith.constant 9.99999993E-9 : f32
    %8 = vector.broadcast %cst : f32 to vector<16x128xf32>
    %9 = arith.addf %3, %8 : vector<16x128xf32>
    %10 = math.log %9 : vector<16x128xf32>
    %cst_6 = arith.constant 1.000000e+00 : f32
    %11 = vector.broadcast %cst_6 : f32 to vector<16x128xf32>
    %12 = arith.subf %11, %3 : vector<16x128xf32>
    %13 = math.log %12 : vector<16x128xf32>
    %14 = arith.subf %10, %13 : vector<16x128xf32>
    %15 = arith.mulf %5, %14 : vector<16x128xf32>
    %16 = arith.addf %13, %15 : vector<16x128xf32>
    %cst_7 = arith.constant 0.000000e+00 : f32
    %17 = vector.broadcast %cst_7 : f32 to vector<16x128xf32>
    %18 = arith.subf %17, %16 : vector<16x128xf32>
    %19 = arith.mulf %7, %5 : vector<16x128xf32>
    %20 = arith.mulf %7, %18 : vector<16x128xf32>
    %21 = arith.mulf %5, %20 : vector<16x128xf32>
    %c0_8 = arith.constant 0 : index
    %c0_9 = arith.constant 0 : index
    %c0_10 = arith.constant 0 : index
    %22 = vector.load %arg6[%c0_8, %c0_9, %c0_10] : memref<4x8x128xf32, #tpu.memory_space<vmem>>, vector<1x8x128xf32>
    %23 = vector.shape_cast %22 : vector<1x8x128xf32> to vector<8x128xf32>
    %24 = vector.shape_cast %19 : vector<16x128xf32> to vector<2x8x128xf32>
    %cst_11 = arith.constant dense<0.000000e+00> : vector<8x128xf32>
    %25 = vector.multi_reduction <add>, %24, %cst_11 [0] : vector<2x8x128xf32> to vector<8x128xf32>
    %26 = arith.addf %23, %25 : vector<8x128xf32>
    %c0_12 = arith.constant 0 : index
    %c0_13 = arith.constant 0 : index
    %c0_14 = arith.constant 0 : index
    %27 = vector.load %arg6[%c0_12, %c0_13, %c0_14] : memref<4x8x128xf32, #tpu.memory_space<vmem>>, vector<1x8x128xf32>
    %28 = vector.shape_cast %27 : vector<1x8x128xf32> to vector<8x128xf32>
    %29 = vector.shape_cast %26 : vector<8x128xf32> to vector<1x8x128xf32>
    tpu.vector_store %arg6[%c0_12, %c0_13, %c0_14], %29 {strides = array<i32>} : memref<4x8x128xf32, #tpu.memory_space<vmem>>, vector<1x8x128xf32>,
    %c1 = arith.constant 1 : index
    %c0_15 = arith.constant 0 : index
    %c0_16 = arith.constant 0 : index
    %30 = vector.load %arg6[%c1, %c0_15, %c0_16] : memref<4x8x128xf32, #tpu.memory_space<vmem>>, vector<1x8x128xf32>
    %31 = vector.shape_cast %30 : vector<1x8x128xf32> to vector<8x128xf32>
    %32 = vector.shape_cast %7 : vector<16x128xf32> to vector<2x8x128xf32>
    %cst_17 = arith.constant dense<0.000000e+00> : vector<8x128xf32>
    %33 = vector.multi_reduction <add>, %32, %cst_17 [0] : vector<2x8x128xf32> to vector<8x128xf32>
    %34 = arith.addf %31, %33 : vector<8x128xf32>
    %c1_18 = arith.constant 1 : index
    %c0_19 = arith.constant 0 : index
    %c0_20 = arith.constant 0 : index
    %35 = vector.load %arg6[%c1_18, %c0_19, %c0_20] : memref<4x8x128xf32, #tpu.memory_space<vmem>>, vector<1x8x128xf32>
    %36 = vector.shape_cast %35 : vector<1x8x128xf32> to vector<8x128xf32>
    %37 = vector.shape_cast %34 : vector<8x128xf32> to vector<1x8x128xf32>
    tpu.vector_store %arg6[%c1_18, %c0_19, %c0_20], %37 {strides = array<i32>} : memref<4x8x128xf32, #tpu.memory_space<vmem>>, vector<1x8x128xf32>,
    %c2 = arith.constant 2 : index
    %c0_21 = arith.constant 0 : index
    %c0_22 = arith.constant 0 : index
    %38 = vector.load %arg6[%c2, %c0_21, %c0_22] : memref<4x8x128xf32, #tpu.memory_space<vmem>>, vector<1x8x128xf32>
    %39 = vector.shape_cast %38 : vector<1x8x128xf32> to vector<8x128xf32>
    %40 = vector.shape_cast %21 : vector<16x128xf32> to vector<2x8x128xf32>
    %cst_23 = arith.constant dense<0.000000e+00> : vector<8x128xf32>
    %41 = vector.multi_reduction <add>, %40, %cst_23 [0] : vector<2x8x128xf32> to vector<8x128xf32>
    %42 = arith.addf %39, %41 : vector<8x128xf32>
    %c2_24 = arith.constant 2 : index
    %c0_25 = arith.constant 0 : index
    %c0_26 = arith.constant 0 : index
    %43 = vector.load %arg6[%c2_24, %c0_25, %c0_26] : memref<4x8x128xf32, #tpu.memory_space<vmem>>, vector<1x8x128xf32>
    %44 = vector.shape_cast %43 : vector<1x8x128xf32> to vector<8x128xf32>
    %45 = vector.shape_cast %42 : vector<8x128xf32> to vector<1x8x128xf32>
    tpu.vector_store %arg6[%c2_24, %c0_25, %c0_26], %45 {strides = array<i32>} : memref<4x8x128xf32, #tpu.memory_space<vmem>>, vector<1x8x128xf32>,
    %c3 = arith.constant 3 : index
    %c0_27 = arith.constant 0 : index
    %c0_28 = arith.constant 0 : index
    %46 = vector.load %arg6[%c3, %c0_27, %c0_28] : memref<4x8x128xf32, #tpu.memory_space<vmem>>, vector<1x8x128xf32>
    %47 = vector.shape_cast %46 : vector<1x8x128xf32> to vector<8x128xf32>
    %48 = vector.shape_cast %20 : vector<16x128xf32> to vector<2x8x128xf32>
    %cst_29 = arith.constant dense<0.000000e+00> : vector<8x128xf32>
    %49 = vector.multi_reduction <add>, %48, %cst_29 [0] : vector<2x8x128xf32> to vector<8x128xf32>
    %50 = arith.addf %47, %49 : vector<8x128xf32>
    %c3_30 = arith.constant 3 : index
    %c0_31 = arith.constant 0 : index
    %c0_32 = arith.constant 0 : index
    %51 = vector.load %arg6[%c3_30, %c0_31, %c0_32] : memref<4x8x128xf32, #tpu.memory_space<vmem>>, vector<1x8x128xf32>
    %52 = vector.shape_cast %51 : vector<1x8x128xf32> to vector<8x128xf32>
    %53 = vector.shape_cast %50 : vector<8x128xf32> to vector<1x8x128xf32>
    tpu.vector_store %arg6[%c3_30, %c0_31, %c0_32], %53 {strides = array<i32>} : memref<4x8x128xf32, #tpu.memory_space<vmem>>, vector<1x8x128xf32>,
    %c0_i32_33 = arith.constant 0 : i32
    %54 = arith.cmpi eq, %arg1, %c0_i32_33 : i32
    %55 = arith.extui %54 : i1 to i32
    %c0_i32_34 = arith.constant 0 : i32
    %56 = arith.cmpi ne, %55, %c0_i32_34 : i32
    scf.if %56 {
      %c0_35 = arith.constant 0 : index
      %c0_36 = arith.constant 0 : index
      %c0_37 = arith.constant 0 : index
      %57 = vector.load %arg6[%c0_35, %c0_36, %c0_37] : memref<4x8x128xf32, #tpu.memory_space<vmem>>, vector<1x8x128xf32>
      %58 = vector.shape_cast %57 : vector<1x8x128xf32> to vector<8x128xf32>
      %59 = vector.shape_cast %58 : vector<8x128xf32> to vector<1x8x128xf32>
      %cst_38 = arith.constant dense<0.000000e+00> : vector<1xf32>
      %60 = vector.multi_reduction <add>, %59, %cst_38 [1, 2] : vector<1x8x128xf32> to vector<1xf32>
      %61 = vector.shape_cast %60 : vector<1xf32> to vector<1x1x1xf32>
      %62 = vector.extract %61[0, 0, 0] : f32 from vector<1x1x1xf32>
      %c1_39 = arith.constant 1 : index
      %c0_40 = arith.constant 0 : index
      %c0_41 = arith.constant 0 : index
      %63 = vector.load %arg6[%c1_39, %c0_40, %c0_41] : memref<4x8x128xf32, #tpu.memory_space<vmem>>, vector<1x8x128xf32>
      %64 = vector.shape_cast %63 : vector<1x8x128xf32> to vector<8x128xf32>
      %65 = vector.shape_cast %64 : vector<8x128xf32> to vector<1x8x128xf32>
      %cst_42 = arith.constant dense<0.000000e+00> : vector<1xf32>
      %66 = vector.multi_reduction <add>, %65, %cst_42 [1, 2] : vector<1x8x128xf32> to vector<1xf32>
      %67 = vector.shape_cast %66 : vector<1xf32> to vector<1x1x1xf32>
      %68 = vector.extract %67[0, 0, 0] : f32 from vector<1x1x1xf32>
      %c2_43 = arith.constant 2 : index
      %c0_44 = arith.constant 0 : index
      %c0_45 = arith.constant 0 : index
      %69 = vector.load %arg6[%c2_43, %c0_44, %c0_45] : memref<4x8x128xf32, #tpu.memory_space<vmem>>, vector<1x8x128xf32>
      %70 = vector.shape_cast %69 : vector<1x8x128xf32> to vector<8x128xf32>
      %71 = vector.shape_cast %70 : vector<8x128xf32> to vector<1x8x128xf32>
      %cst_46 = arith.constant dense<0.000000e+00> : vector<1xf32>
      %72 = vector.multi_reduction <add>, %71, %cst_46 [1, 2] : vector<1x8x128xf32> to vector<1xf32>
      %73 = vector.shape_cast %72 : vector<1xf32> to vector<1x1x1xf32>
      %74 = vector.extract %73[0, 0, 0] : f32 from vector<1x1x1xf32>
      %c3_47 = arith.constant 3 : index
      %c0_48 = arith.constant 0 : index
      %c0_49 = arith.constant 0 : index
      %75 = vector.load %arg6[%c3_47, %c0_48, %c0_49] : memref<4x8x128xf32, #tpu.memory_space<vmem>>, vector<1x8x128xf32>
      %76 = vector.shape_cast %75 : vector<1x8x128xf32> to vector<8x128xf32>
      %77 = vector.shape_cast %76 : vector<8x128xf32> to vector<1x8x128xf32>
      %cst_50 = arith.constant dense<0.000000e+00> : vector<1xf32>
      %78 = vector.multi_reduction <add>, %77, %cst_50 [1, 2] : vector<1x8x128xf32> to vector<1xf32>
      %79 = vector.shape_cast %78 : vector<1xf32> to vector<1x1x1xf32>
      %80 = vector.extract %79[0, 0, 0] : f32 from vector<1x1x1xf32>
      %81 = tpu.iota {dimensions = array<i32: 2>} : vector<1x1x128xi32>
      %c0_i32_51 = arith.constant 0 : i32
      %82 = vector.broadcast %c0_i32_51 : i32 to vector<1x1x128xi32>
      %83 = arith.cmpi eq, %81, %82 : vector<1x1x128xi32>
      %cst_52 = arith.constant 0.000000e+00 : f32
      %84 = vector.broadcast %62 : f32 to vector<1x1x128xf32>
      %85 = vector.broadcast %cst_52 : f32 to vector<1x1x128xf32>
      %86 = arith.select %83, %84, %85 : vector<1x1x128xi1>, vector<1x1x128xf32>
      %c1_i32 = arith.constant 1 : i32
      %87 = vector.broadcast %c1_i32 : i32 to vector<1x1x128xi32>
      %88 = arith.cmpi eq, %81, %87 : vector<1x1x128xi32>
      %cst_53 = arith.constant 0.000000e+00 : f32
      %89 = vector.broadcast %68 : f32 to vector<1x1x128xf32>
      %90 = vector.broadcast %cst_53 : f32 to vector<1x1x128xf32>
      %91 = arith.select %88, %89, %90 : vector<1x1x128xi1>, vector<1x1x128xf32>
      %92 = arith.addf %86, %91 : vector<1x1x128xf32>
      %c2_i32 = arith.constant 2 : i32
      %93 = vector.broadcast %c2_i32 : i32 to vector<1x1x128xi32>
      %94 = arith.cmpi eq, %81, %93 : vector<1x1x128xi32>
      %cst_54 = arith.constant 0.000000e+00 : f32
      %95 = vector.broadcast %74 : f32 to vector<1x1x128xf32>
      %96 = vector.broadcast %cst_54 : f32 to vector<1x1x128xf32>
      %97 = arith.select %94, %95, %96 : vector<1x1x128xi1>, vector<1x1x128xf32>
      %98 = arith.addf %92, %97 : vector<1x1x128xf32>
      %c3_i32 = arith.constant 3 : i32
      %99 = vector.broadcast %c3_i32 : i32 to vector<1x1x128xi32>
      %100 = arith.cmpi eq, %81, %99 : vector<1x1x128xi32>
      %cst_55 = arith.constant 0.000000e+00 : f32
      %101 = vector.broadcast %80 : f32 to vector<1x1x128xf32>
      %102 = vector.broadcast %cst_55 : f32 to vector<1x1x128xf32>
      %103 = arith.select %100, %101, %102 : vector<1x1x128xi1>, vector<1x1x128xf32>
      %104 = arith.addf %98, %103 : vector<1x1x128xf32>
      %c0_56 = arith.constant 0 : index
      %c0_57 = arith.constant 0 : index
      %c0_58 = arith.constant 0 : index
      %105 = vector.load %arg5[%c0_56, %c0_57, %c0_58] : memref<1x1x128xf32, #tpu.memory_space<vmem>>, vector<1x1x128xf32>
      tpu.vector_store %arg5[%c0_56, %c0_57, %c0_58], %104 {strides = array<i32>} : memref<1x1x128xf32, #tpu.memory_space<vmem>>, vector<1x1x128xf32>,
    } else {
    }
    return
  }
  func.func @transform_0(%arg0: i32, %arg1: i32) -> (i32, i32) {
    %c1_i32 = arith.constant 1 : i32
    %0 = arith.muli %arg0, %c1_i32 : i32
    %1 = arith.addi %0, %arg1 : i32
    %c0_i32 = arith.constant 0 : i32
    %2 = arith.minsi %1, %c0_i32 : i32
    %c0_i32_0 = arith.constant 0 : i32
    %c0_i32_1 = arith.constant 0 : i32
    return %2, %c0_i32_0 : i32, i32
  }
  func.func @transform_1(%arg0: i32, %arg1: i32) -> (i32, i32) {
    %c1_i32 = arith.constant 1 : i32
    %0 = arith.muli %arg0, %c1_i32 : i32
    %1 = arith.addi %0, %arg1 : i32
    %c0_i32 = arith.constant 0 : i32
    %2 = arith.minsi %1, %c0_i32 : i32
    %c0_i32_0 = arith.constant 0 : i32
    %c0_i32_1 = arith.constant 0 : i32
    return %2, %c0_i32_0 : i32, i32
  }
  func.func @transform_2(%arg0: i32, %arg1: i32) -> (i32, i32) {
    %c1_i32 = arith.constant 1 : i32
    %0 = arith.muli %arg0, %c1_i32 : i32
    %1 = arith.addi %0, %arg1 : i32
    %c0_i32 = arith.constant 0 : i32
    %2 = arith.minsi %1, %c0_i32 : i32
    %c0_i32_0 = arith.constant 0 : i32
    %c0_i32_1 = arith.constant 0 : i32
    return %2, %c0_i32_0 : i32, i32
  }
  func.func @transform_3(%arg0: i32, %arg1: i32) -> (i32, i32, i32) {
    %c0_i32 = arith.constant 0 : i32
    %c0_i32_0 = arith.constant 0 : i32
    %c0_i32_1 = arith.constant 0 : i32
    return %arg0, %c0_i32, %c0_i32_0 : i32, i32, i32
  }
}

</mosaic_0001>

<llo_original>
// kernel: _sketch_mask_loss_impl.1
$region0: #{_sketch_mask_loss_impl.1}
  #allocation0 [shape = 'u32[]', space=smem, size = 0x4, offset = 0x4, fixed_abs, tag = 'smem constant byte address 0x4 - core index']
  #allocation1 [shape = 'u32[144,128]{1,0:T(1,128)}', space=vmem, size = 0x12000, scoped, tag = 'internal scratch']
  #allocation2 [shape = 'f32[4,8,128]{2,1,0:T(8,128)}', space=vmem, size = 0x4000, scoped, tag = 'scratch operand']
  %s0 = inlined_call_operand.vmem [shape: f32[16,128], index: 0, kind: input, shape index: {}]
  %s1 = inlined_call_operand.vmem [shape: bf16[16,128], index: 1, kind: input, shape index: {}]
  %s2 = inlined_call_operand.vmem [shape: bf16[16,128], index: 2, kind: input, shape index: {}]
  %s3 = inlined_call_operand.vmem [shape: f32[1,1,128], index: 3, kind: output, shape index: {}]
  %s4 = sld [smem:[#allocation0]]
  $region30: #{_sketch_mask_loss_impl.1} parent=0
    _
  %s6 = ssub.s32 1, %s4
  %s7 = scalar_select 0, %s6, %s4
  // Predicated region
  $region2: #{_sketch_mask_loss_impl.1} parent=0 // pred_check
    _
  $region3: #{_sketch_mask_loss_impl.1} parent=0 // pred_check_branch
    %9 = sbr.rel (0) target = $region5
  $region4: #{_sketch_mask_loss_impl.1} parent=0 // pred_region
    %s10 = sadd.s32 0, 0
    %p11 = scmp.lt.s32.totalorder %s10, 0
    %s12 = scalar_select %p11, %s10, 0
    %s13 = smul.u32 2, %s12
    %p14 = scmp.lt.s32.totalorder %s13, 1
    %s15 = scalar_select %p14, %s13, 1
    %s16 = smul.addr %s15, 8
    %s17 = scalar_lea.vmem %s0, %s16
    %s18 = sadd.s32 0, 0
    %p19 = scmp.lt.s32.totalorder %s18, 0
    %s20 = scalar_select %p19, %s18, 0
    %s21 = smul.u32 2, %s20
  $region5: #{_sketch_mask_loss_impl.1} parent=0 // pred_fallthru
    _
  // Predicated region
  $region6: #{_sketch_mask_loss_impl.1} parent=0 // pred_check
    _
  $region7: #{_sketch_mask_loss_impl.1} parent=0 // pred_check_branch
    %23 = sbr.rel (0) target = $region9
  $region8: #{_sketch_mask_loss_impl.1} parent=0 // pred_region
    %s24 = sadd.s32 0, 0
    %p25 = scmp.lt.s32.totalorder %s24, 0
    %s26 = scalar_select %p25, %s24, 0
    %s27 = smul.u32 2, %s26
    %p28 = scmp.lt.s32.totalorder %s27, 1
    %s29 = scalar_select %p28, %s27, 1
    %s30 = smul.addr %s29, 4
    %s31 = scalar_lea.vmem %s1, %s30
    %s32 = sadd.s32 0, 0
    %p33 = scmp.lt.s32.totalorder %s32, 0
    %s34 = scalar_select %p33, %s32, 0
    %s35 = smul.u32 2, %s34
  $region9: #{_sketch_mask_loss_impl.1} parent=0 // pred_fallthru
    _
  // Predicated region
  $region10: #{_sketch_mask_loss_impl.1} parent=0 // pred_check
    _
  $region11: #{_sketch_mask_loss_impl.1} parent=0 // pred_check_branch
    %37 = sbr.rel (0) target = $region13
  $region12: #{_sketch_mask_loss_impl.1} parent=0 // pred_region
    %s38 = sadd.s32 0, 0
    %p39 = scmp.lt.s32.totalorder %s38, 0
    %s40 = scalar_select %p39, %s38, 0
    %s41 = smul.u32 2, %s40
    %p42 = scmp.lt.s32.totalorder %s41, 1
    %s43 = scalar_select %p42, %s41, 1
    %s44 = smul.addr %s43, 4
    %s45 = scalar_lea.vmem %s2, %s44
    %s46 = sadd.s32 0, 0
    %p47 = scmp.lt.s32.totalorder %s46, 0
    %s48 = scalar_select %p47, %s46, 0
    %s49 = smul.u32 2, %s48
  $region13: #{_sketch_mask_loss_impl.1} parent=0 // pred_fallthru
    _
  %s50 = sadd.s32 0, 0
  %p51 = scmp.lt.s32.totalorder %s50, 0
  %s52 = scalar_select %p51, %s50, 0
  %s53 = smul.u32 2, %s52
  %p54 = scmp.lt.s32.totalorder %s53, 1
  %s55 = scalar_select %p54, %s53, 1
  %s56 = smul.addr %s55, 8
  %s57 = scalar_lea.vmem %s0, %s56
  %s58 = sadd.s32 0, 0
  %p59 = scmp.lt.s32.totalorder %s58, 0
  %s60 = scalar_select %p59, %s58, 0
  %s61 = smul.u32 2, %s60
  %p62 = scmp.lt.s32.totalorder %s61, 1
  %s63 = scalar_select %p62, %s61, 1
  %s64 = smul.addr %s63, 4
  %s65 = scalar_lea.vmem %s1, %s64
  %s66 = sadd.s32 0, 0
  %p67 = scmp.lt.s32.totalorder %s66, 0
  %s68 = scalar_select %p67, %s66, 0
  %s69 = smul.u32 2, %s68
  %p70 = scmp.lt.s32.totalorder %s69, 1
  %s71 = scalar_select %p70, %s69, 1
  %s72 = smul.addr %s71, 4
  %s73 = scalar_lea.vmem %s2, %s72
  %s74 = sadd.s32 0, 0
  %p75 = scmp.lt.s32.totalorder %s74, 0
  %s76 = scalar_select %p75, %s74, 0
  %s77 = smul.u32 2, %s76
  %p78 = scmp.lt.s32.totalorder %s77, 1
  %s79 = scalar_select %p78, %s77, 1
  %s80 = smul.addr %s79, 8
  %s81 = scalar_lea.vmem %s0, %s80
  %s82 = sadd.s32 0, 0
  %p83 = scmp.lt.s32.totalorder %s82, 0
  %s84 = scalar_select %p83, %s82, 0
  %s85 = smul.u32 2, %s84
  %s86 = sadd.s32 0, 0
  %p87 = scmp.lt.s32.totalorder %s86, 0
  %s88 = scalar_select %p87, %s86, 0
  %s89 = smul.u32 2, %s88
  %p90 = scmp.lt.s32.totalorder %s89, 1
  %s91 = scalar_select %p90, %s89, 1
  %s92 = smul.addr %s91, 4
  %s93 = scalar_lea.vmem %s1, %s92
  %s94 = sadd.s32 0, 0
  %p95 = scmp.lt.s32.totalorder %s94, 0
  %s96 = scalar_select %p95, %s94, 0
  %s97 = smul.u32 2, %s96
  %s98 = sadd.s32 0, 0
  %p99 = scmp.lt.s32.totalorder %s98, 0
  %s100 = scalar_select %p99, %s98, 0
  %s101 = smul.u32 2, %s100
  %p102 = scmp.lt.s32.totalorder %s101, 1
  %s103 = scalar_select %p102, %s101, 1
  %s104 = smul.addr %s103, 4
  %s105 = scalar_lea.vmem %s2, %s104
  %s106 = sadd.s32 0, 0
  %p107 = scmp.lt.s32.totalorder %s106, 0
  %s108 = scalar_select %p107, %s106, 0
  %s109 = smul.u32 2, %s108
  %p110 = scmp.eq.s32.totalorder 0, 0
  // Predicated region
  $region14: #{_sketch_mask_loss_impl.1} parent=0 // pred_check
    %p111 = pneg %p110
  $region15: #{_sketch_mask_loss_impl.1} parent=0 // pred_check_branch
    %113 = sbr.rel (%p111) target = $region17
  $region16: #{_sketch_mask_loss_impl.1} parent=0 // pred_region
    %114 = vst [vmem:[#allocation2] sm:$0xff] 0.0
    %115 = vst [vmem:[#allocation2 + $0x8] sm:$0xff] 0.0
    %116 = vst [vmem:[#allocation2 + $0x10] sm:$0xff] 0.0
    %117 = vst [vmem:[#allocation2 + $0x18] sm:$0xff] 0.0
  $region17: #{_sketch_mask_loss_impl.1} parent=0 // pred_fallthru
    _
  %v118 = vld [vmem:[%s81] sm:$0xff]
  %v119 = vld [vmem:[%s81 + $0x8] sm:$0xff]
  %v120 = vld [vmem:[%s93] sm:$0xf]
  %v121 = vld [vmem:[%s93 + $0x4] sm:$0xf]
  %v122 = vunpack.c.l.bf16 %v120
  %v123 = vunpack.c.l.bf16 %v121
  %v124 = vld [vmem:[%s105] sm:$0xf]
  %v125 = vld [vmem:[%s105 + $0x4] sm:$0xf]
  %v126 = vunpack.c.l.bf16 %v124
  %v127 = vunpack.c.l.bf16 %v125
  %v128 = vadd.f32 %v118, 1e-08
  %v129 = vadd.f32 %v119, 1e-08
  %v130 = vlog2.pop %v128
  %v131 = vmul.f32 %v130, 0.6931472
  %v132 = vlog2.pop %v129
  %v133 = vmul.f32 %v132, 0.6931472
  %v134 = vsub.f32 1.0, %v118
  %v135 = vsub.f32 1.0, %v119
  %v136 = vlog2.pop %v134
  %v137 = vmul.f32 %v136, 0.6931472
  %v138 = vlog2.pop %v135
  %v139 = vmul.f32 %v138, 0.6931472
  %v140 = vsub.f32 %v131, %v137
  %v141 = vsub.f32 %v133, %v139
  %v142 = vmul.f32 %v122, %v140
  %v143 = vmul.f32 %v123, %v141
  %v144 = vadd.f32 %v137, %v142
  %v145 = vadd.f32 %v139, %v143
  %v146 = vsub.f32 0.0, %v144
  %v147 = vsub.f32 0.0, %v145
  %v148 = vmul.f32 %v126, %v122
  %v149 = vmul.f32 %v127, %v123
  %v150 = vmul.f32 %v126, %v146
  %v151 = vmul.f32 %v127, %v147
  %v152 = vmul.f32 %v122, %v150
  %v153 = vmul.f32 %v123, %v151
  %v154 = vld [vmem:[#allocation2] sm:$0xff]
  %v155 = vadd.f32 %v148, %v149
  %v156 = vadd.f32 %v154, %v155
  %157 = vst [vmem:[#allocation2] sm:$0xff] %v156
  %s158 = scalar_lea.vmem [#allocation2], 8
  %v159 = vld [vmem:[%s158] sm:$0xff]
  %v160 = vadd.f32 %v126, %v127
  %v161 = vadd.f32 %v159, %v160
  %162 = vst [vmem:[%s158] sm:$0xff] %v161
  %s163 = scalar_lea.vmem [#allocation2], 16
  %v164 = vld [vmem:[%s163] sm:$0xff]
  %v165 = vadd.f32 %v152, %v153
  %v166 = vadd.f32 %v164, %v165
  %167 = vst [vmem:[%s163] sm:$0xff] %v166
  %s168 = scalar_lea.vmem [#allocation2], 24
  %v169 = vld [vmem:[%s168] sm:$0xff]
  %v170 = vadd.f32 %v150, %v151
  %v171 = vadd.f32 %v169, %v170
  %172 = vst [vmem:[%s168] sm:$0xff] %v171
  // Predicated region
  $region18: #{_sketch_mask_loss_impl.1} parent=0 // pred_check
    %p173 = pneg %p110
  $region19: #{_sketch_mask_loss_impl.1} parent=0 // pred_check_branch
    %175 = sbr.rel (%p173) target = $region21
  $region20: #{_sketch_mask_loss_impl.1} parent=0 // pred_region
    %v176 = vld [vmem:[#allocation2] sm:$0xff]
    %177 = vadd.xlane.f32.xlu0 %v176
    %v178 = vpop.xlane.xlu0 %177
    %v179 = vrot.slane %v178, 4
    %v180 = vadd.f32 %v178, %v179
    %v181 = vrot.slane %v180, 2
    %v182 = vadd.f32 %v180, %v181
    %v183 = vrot.slane %v182, 1
    %v184 = vadd.f32 %v182, %v183
    %s185 = vtos %v184
    %v186 = vld [vmem:[%s158] sm:$0xff]
    %187 = vadd.xlane.f32.xlu0 %v186
    %v188 = vpop.xlane.xlu0 %187
    %v189 = vrot.slane %v188, 4
    %v190 = vadd.f32 %v188, %v189
    %v191 = vrot.slane %v190, 2
    %v192 = vadd.f32 %v190, %v191
    %v193 = vrot.slane %v192, 1
    %v194 = vadd.f32 %v192, %v193
    %s195 = vtos %v194
    %v196 = vld [vmem:[%s163] sm:$0xff]
    %197 = vadd.xlane.f32.xlu0 %v196
    %v198 = vpop.xlane.xlu0 %197
    %v199 = vrot.slane %v198, 4
    %v200 = vadd.f32 %v198, %v199
    %v201 = vrot.slane %v200, 2
    %v202 = vadd.f32 %v200, %v201
    %v203 = vrot.slane %v202, 1
    %v204 = vadd.f32 %v202, %v203
    %s205 = vtos %v204
    %v206 = vld [vmem:[%s168] sm:$0xff]
    %207 = vadd.xlane.f32.xlu0 %v206
    %v208 = vpop.xlane.xlu0 %207
    %v209 = vrot.slane %v208, 4
    %v210 = vadd.f32 %v208, %v209
    %v211 = vrot.slane %v210, 2
    %v212 = vadd.f32 %v210, %v211
    %v213 = vrot.slane %v212, 1
    %v214 = vadd.f32 %v212, %v213
    %s215 = vtos %v214
    %v216 = vlaneseq
    %v217 = vand.u32 %v216, 127
    %vm218 = vcmp.eq.s32.totalorder %v217, 0
    %v219 = vstv %s185
    %v220 = vsel %vm218, %v219, 0.0
    %vm221 = vcmp.eq.s32.totalorder %v217, 1
    %v222 = vstv %s195
    %v223 = vsel %vm221, %v222, 0.0
    %v224 = vadd.f32 %v220, %v223
    %vm225 = vcmp.eq.s32.totalorder %v217, 2
    %v226 = vstv %s205
    %v227 = vsel %vm225, %v226, 0.0
    %v228 = vadd.f32 %v224, %v227
    %vm229 = vcmp.eq.s32.totalorder %v217, 3
    %v230 = vstv %s215
    %v231 = vsel %vm229, %v230, 0.0
    %v232 = vadd.f32 %v228, %v231
    %233 = vst [vmem:[%s3] sm:$0x1] %v232
  $region21: #{_sketch_mask_loss_impl.1} parent=0 // pred_fallthru
    _
  // Predicated region
  $region22: #{_sketch_mask_loss_impl.1} parent=0 // pred_check
    _
  $region23: #{_sketch_mask_loss_impl.1} parent=0 // pred_check_branch
    %235 = sbr.rel (0) target = $region25
  $region24: #{_sketch_mask_loss_impl.1} parent=0 // pred_region
    _
  $region25: #{_sketch_mask_loss_impl.1} parent=0 // pred_fallthru
    _
  // Predicated region
  $region26: #{_sketch_mask_loss_impl.1} parent=0 // pred_check
    _
  $region27: #{_sketch_mask_loss_impl.1} parent=0 // pred_check_branch
    %237 = sbr.rel (0) target = $region29
  $region28: #{_sketch_mask_loss_impl.1} parent=0 // pred_region
    _
  $region29: #{_sketch_mask_loss_impl.1} parent=0 // pred_fallthru
    _

</llo_original>
